<compile_context>
chip_gen: v7x
topology: tpu7x:2x2x1
jax: 0.10.0
libtpu: 0.0.40
codegen_flags: <defaults>
</compile_context>

<pallas_src>
import functools
import math

import jax
import jax.numpy as jnp
from jax.experimental import pallas as pl
from jax.experimental.pallas import tpu as pltpu


_NEG_BIG = -1e30  # large finite negative for causal masking (NaN-safe vs -inf)


def _layernorm_f32(x, w, b, eps):
    mean = jnp.mean(x, axis=-1, keepdims=True)
    xc = x - mean
    var = jnp.mean(xc * xc, axis=-1, keepdims=True)
    return xc * jax.lax.rsqrt(var + eps) * w + b


def _vmem_limit_bytes(footprint_bytes):
    """2x estimated footprint, floored at 32 MiB, capped at ~75% of physical VMEM
    (=> ~48 MiB on 64 MiB parts like v7x, ~96 MiB on 128 MiB parts like v5e/v6e)."""
    try:
        cap = int(pltpu.get_tpu_info().vmem_capacity_bytes)
    except Exception:
        cap = 64 * 1024 * 1024  # conservative fallback
    return int(min(max(2 * footprint_bytes, 32 * 1024 * 1024), (3 * cap) // 4))


# --------------------------------------------------------------------------------------
# Stage 1: LayerNorm + fused QKV projection, head-major outputs.
# --------------------------------------------------------------------------------------
def _qkv_proj_kernel(x_ref, pe_ref, lnw_ref, lnb_ref, w_ref,
                     q_ref, k_ref, v_ref, *, n_head, eps, tp, compute_dtype):
    E = x_ref.shape[-1]
    H = n_head
    Dh = E // H

    x = x_ref[0].astype(jnp.float32)                                 # (tp, E)
    h = _layernorm_f32(x, lnw_ref[...], lnb_ref[...], eps)           # (tp, E) f32

    # One fused (tp,E) @ (E,3E) MXU matmul: columns = [scale*Wq | Wk | Wv].
    qkv = jnp.dot(h.astype(compute_dtype), w_ref[...],
                  preferred_element_type=jnp.float32)                # (tp, 3E) f32
    # Positional-encoding contribution, precomputed outside the kernel:
    # [scale*pe@Wq | pe@Wk | 0]  (V is projected from the LN output only).
    qkv = qkv + pe_ref[...]

    def head_major(m):                                               # (tp,E) -> (H,tp,Dh)
        return jnp.transpose(m.reshape(tp, H, Dh), (1, 0, 2))

    q_ref[0] = head_major(qkv[:, :E]).astype(q_ref.dtype)
    k_ref[0] = head_major(qkv[:, E:2 * E]).astype(k_ref.dtype)
    v_ref[0] = head_major(qkv[:, 2 * E:]).astype(v_ref.dtype)


# --------------------------------------------------------------------------------------
# Stage 2: flash attention (online softmax) + fused out-projection + residual.
# --------------------------------------------------------------------------------------
def _flash_attn_kernel(q_ref, k_ref, v_ref, x_ref, wo_ref, o_ref,
                       m_sc, l_sc, acc_sc, *, tq, tkv, compute_dtype):
    qi = pl.program_id(1)
    ki = pl.program_id(2)
    nk = pl.num_programs(2)

    E = x_ref.shape[-1]
    q_start = qi * tq
    kv_start = ki * tkv

    # ---- init softmax state once per (batch, query-tile) ----
    @pl.when(ki == 0)
    def _init():
        m_sc[...] = jnp.full_like(m_sc, -jnp.inf)
        l_sc[...] = jnp.zeros_like(l_sc)
        acc_sc[...] = jnp.zeros_like(acc_sc)

    # ---- skip KV tiles entirely above the causal diagonal ----
    @pl.when(kv_start <= q_start + tq - 1)
    def _compute():
        qh = q_ref[0]                                 # (H, tq, Dh)  head-major, no transposes
        kh = k_ref[0]                                 # (H, tkv, Dh)
        vh = v_ref[0]                                 # (H, tkv, Dh)

        s = jnp.einsum('hqd,hkd->hqk', qh, kh,
                       preferred_element_type=jnp.float32)           # (H, tq, tkv) f32

        def online_update(scores):
            m_prev = m_sc[...]                                        # (H, tq, 1)
            m_new = jnp.maximum(m_prev, jnp.max(scores, axis=-1, keepdims=True))
            alpha = jnp.exp(m_prev - m_new)
            p = jnp.exp(scores - m_new)                               # (H, tq, tkv) f32
            l_sc[...] = alpha * l_sc[...] + jnp.sum(p, axis=-1, keepdims=True)
            acc_sc[...] = alpha * acc_sc[...] + jnp.einsum(
                'hqk,hkd->hqd', p.astype(compute_dtype), vh,
                preferred_element_type=jnp.float32)                   # (H, tq, Dh)
            m_sc[...] = m_new

        crosses_diag = kv_start + tkv - 1 > q_start

        # mask only diagonal-crossing tiles; fully-visible tiles skip the VPU mask work
        @pl.when(crosses_diag)
        def _masked():
            row = q_start + jax.lax.broadcasted_iota(jnp.int32, (tq, tkv), 0)
            col = kv_start + jax.lax.broadcasted_iota(jnp.int32, (tq, tkv), 1)
            keep = (col <= row)[None, :, :]
            online_update(jnp.where(keep, s, _NEG_BIG))

        @pl.when(jnp.logical_not(crosses_diag))
        def _unmasked():
            online_update(s)

    # ---- finalize: normalize, concat heads, fused out-proj, residual, store ----
    @pl.when(ki == nk - 1)
    def _finalize():
        if jnp.dtype(compute_dtype) == jnp.dtype(jnp.float32):
            inv_l = 1.0 / l_sc[...]                            # exact for f32 parity
        else:
            inv_l = pl.reciprocal(l_sc[...], approx=True)      # EUP slot, ~free
        o_h = (acc_sc[...] * inv_l).astype(compute_dtype)      # (H, tq, Dh)
        o_cat = jnp.transpose(o_h, (1, 0, 2)).reshape(tq, E)   # once per q-tile only
        out = jnp.dot(o_cat, wo_ref[...], preferred_element_type=jnp.float32)
        o_ref[0] = (x_ref[0].astype(jnp.float32) + out).astype(o_ref.dtype)


# --------------------------------------------------------------------------------------
# Wrapper
# --------------------------------------------------------------------------------------
def attention_only_block(x, pe, ln_w, ln_b, wq_t, wk_t, wv_t, wo_t, *,
                         n_head, eps=1e-5, q_tile=256, kv_tile=256, proj_tile=256,
                         compute_dtype=jnp.bfloat16):
    """x: (B, T, E). pe: (T, E). ln_*: (1, E). w*_t: (E, E) pre-transposed (x @ W^T)."""
    B, T, E = x.shape
    assert pe.shape == (T, E)
    assert E % n_head == 0
    H = n_head
    Dh = E // H
    scale = 1.0 / math.sqrt(Dh)

    tq = min(q_tile, T)
    tkv = min(kv_tile, T)
    tp = min(proj_tile, T)
    assert T % tq == 0 and T % tkv == 0 and T % tp == 0, \
        "T must be divisible by the tile sizes"
    nq, nk, nt = T // tq, T // tkv, T // tp

    wbytes = jnp.dtype(compute_dtype).itemsize
    xbytes = x.dtype.itemsize

    # Host-side constant prep (runs once in XLA): fold 1/sqrt(Dh) into Wq, fuse the
    # three projection weights, precompute the positional-encoding projections.
    w_qkv = jnp.concatenate([wq_t * scale, wk_t, wv_t], axis=1).astype(compute_dtype)  # (E,3E)
    pe32 = pe.astype(jnp.float32)
    pe_qkv = jnp.concatenate(
        [(pe32 @ wq_t) * scale, pe32 @ wk_t, jnp.zeros((T, E), jnp.float32)], axis=1)   # (T,3E)
    wo_c = wo_t.astype(compute_dtype)

    # ------------------ stage 1: LN + fused QKV projection ------------------
    prologue_footprint = (
        2 * tp * E * xbytes            # x tile (double-buffered)
        + 2 * tp * 3 * E * 4           # pe_qkv tile
        + 2 * 2 * E * 4                # LN params
        + 2 * E * 3 * E * wbytes       # fused QKV weight
        + 2 * 3 * tp * E * wbytes      # q/k/v output tiles
        + 6 * tp * 3 * E * 4           # in-kernel temporaries (h, qkv, splits)
    )
    qkv_kernel = functools.partial(_qkv_proj_kernel, n_head=H, eps=eps, tp=tp,
                                   compute_dtype=compute_dtype)
    q_hm, k_hm, v_hm = pl.pallas_call(
        qkv_kernel,
        out_shape=(jax.ShapeDtypeStruct((B, H, T, Dh), compute_dtype),) * 3,
        grid_spec=pltpu.PrefetchScalarGridSpec(
            num_scalar_prefetch=0,
            grid=(B, nt),
            in_specs=[
                pl.BlockSpec((1, tp, E), lambda b, t: (b, t, 0)),       # x rows
                pl.BlockSpec((tp, 3 * E), lambda b, t: (t, 0)),         # pe projections
                pl.BlockSpec((1, E), lambda b, t: (0, 0)),              # ln weight
                pl.BlockSpec((1, E), lambda b, t: (0, 0)),              # ln bias
                pl.BlockSpec((E, 3 * E), lambda b, t: (0, 0)),          # fused [sWq|Wk|Wv]
            ],
            out_specs=(pl.BlockSpec((1, H, tp, Dh), lambda b, t: (b, 0, t, 0)),) * 3,
        ),
        compiler_params=pltpu.CompilerParams(
            dimension_semantics=("parallel", "parallel"),
            vmem_limit_bytes=_vmem_limit_bytes(prologue_footprint),
        ),
    )(x, pe_qkv, ln_w, ln_b, w_qkv)

    # ------------------ stage 2: flash attention ------------------
    attn_footprint = (
        2 * tq * E * wbytes            # Q tile (head-major, double-buffered)
        + 2 * 2 * tkv * E * wbytes     # K, V tiles
        + 2 * tq * E * xbytes          # residual x tile
        + 2 * E * E * wbytes           # Wo
        + 2 * tq * E * xbytes          # output tile
        + tq * E * 4 + 2 * H * tq * 4  # acc / m / l scratch
        + 6 * H * tq * tkv * 4         # score / prob temporaries
        + 4 * tq * E * 4               # finalize temporaries
    )

    def q_index(b, qi, ki):
        return (b, 0, qi, 0)

    def kv_index(b, qi, ki):
        # Clamp at the causal diagonal: grid steps above it re-use the previous
        # block index, so Pallas issues no DMA for causally-skipped KV tiles.
        last_needed = (qi * tq + tq - 1) // tkv
        return (b, 0, jnp.minimum(ki, last_needed), 0)

    attn_kernel = functools.partial(_flash_attn_kernel, tq=tq, tkv=tkv,
                                    compute_dtype=compute_dtype)
    return pl.pallas_call(
        attn_kernel,
        out_shape=jax.ShapeDtypeStruct((B, T, E), x.dtype),
        grid_spec=pltpu.PrefetchScalarGridSpec(
            num_scalar_prefetch=0,
            grid=(B, nq, nk),
            in_specs=[
                pl.BlockSpec((1, H, tq, Dh), q_index),                      # Q (head-major)
                pl.BlockSpec((1, H, tkv, Dh), kv_index),                    # K (head-major)
                pl.BlockSpec((1, H, tkv, Dh), kv_index),                    # V (head-major)
                pl.BlockSpec((1, tq, E), lambda b, qi, ki: (b, qi, 0)),     # x (residual)
                pl.BlockSpec((E, E), lambda b, qi, ki: (0, 0)),             # Wo^T
            ],
            out_specs=pl.BlockSpec((1, tq, E), lambda b, qi, ki: (b, qi, 0)),
            scratch_shapes=[
                pltpu.VMEM((H, tq, 1), jnp.float32),    # running max m
                pltpu.VMEM((H, tq, 1), jnp.float32),    # running sum l
                pltpu.VMEM((H, tq, Dh), jnp.float32),   # output accumulator
            ],
        ),
        compiler_params=pltpu.CompilerParams(
            # batch and query-tile axes are independent -> megacore / 2-TC sharding
            # on v7x (needs B * nq >= 2 to actually split across cores).
            dimension_semantics=("parallel", "parallel", "arbitrary"),
            vmem_limit_bytes=_vmem_limit_bytes(attn_footprint),
        ),
    )(q_hm, k_hm, v_hm, x, wo_c)


# --------------------------------------------------------------------------------------
# Helpers / reference / test harness
# --------------------------------------------------------------------------------------
def make_sinusoidal_pe(max_len: int, d_model: int):
    position = jnp.arange(max_len, dtype=jnp.float32)[:, None]
    div_term = jnp.exp(jnp.arange(0, d_model, 2, dtype=jnp.float32)
                       * (-math.log(10000.0) / d_model))
    pe = jnp.zeros((max_len, d_model), jnp.float32)
    pe = pe.at[:, 0::2].set(jnp.sin(position * div_term))
    pe = pe.at[:, 1::2].set(jnp.cos(position * div_term))
    return pe


def reference_jax(x, pe, ln_w, ln_b, wq_t, wk_t, wv_t, wo_t, n_head, eps=1e-5):
    B, T, E = x.shape
    Dh = E // n_head
    mean = jnp.mean(x, -1, keepdims=True)
    var = jnp.mean((x - mean) ** 2, -1, keepdims=True)
    h_in = (x - mean) / jnp.sqrt(var + eps) * ln_w[0] + ln_b[0]
    px = h_in + pe[None]
    q = px @ wq_t
    k = px @ wk_t
    v = h_in @ wv_t
    q = q.reshape(B, T, n_head, Dh).transpose(0, 2, 1, 3)
    k = k.reshape(B, T, n_head, Dh).transpose(0, 2, 1, 3)
    v = v.reshape(B, T, n_head, Dh).transpose(0, 2, 1, 3)
    s = jnp.einsum("bhqd,bhkd->bhqk", q, k) / math.sqrt(Dh)
    mask = jnp.tril(jnp.ones((T, T), bool))
    s = jnp.where(mask, s, -jnp.inf)
    p = jax.nn.softmax(s, axis=-1)
    o = jnp.einsum("bhqk,bhkd->bhqd", p, v).transpose(0, 2, 1, 3).reshape(B, T, E)
    return x + o @ wo_t


if __name__ == "__main__":
    B, T, E, H = 2, 8, 32, 4          # batch, seq, n_embed, n_head
    BLOCK_SIZE = 16                   # max_len of the sinusoidal encoding

    key = jax.random.PRNGKey(0)
    kx, kq, kk, kv, ko = jax.random.split(key, 5)

    x = jax.random.normal(kx, (B, T, E), jnp.float32)

    # nn.MultiheadAttention (bias=False): in_proj (3E,E) split into Wq/Wk/Wv, out_proj (E,E).
    # Stored pre-transposed so the kernels do x @ W^T.
    scale = 1.0 / math.sqrt(E)
    wq = jax.random.uniform(kq, (E, E), jnp.float32, -scale, scale)
    wk = jax.random.uniform(kk, (E, E), jnp.float32, -scale, scale)
    wv = jax.random.uniform(kv, (E, E), jnp.float32, -scale, scale)
    wo = jax.random.uniform(ko, (E, E), jnp.float32, -scale, scale)
    wq_t, wk_t, wv_t, wo_t = wq.T, wk.T, wv.T, wo.T

    # LayerNorm default init: weight=1, bias=0
    ln_w = jnp.ones((1, E), jnp.float32)
    ln_b = jnp.zeros((1, E), jnp.float32)

    pe = make_sinusoidal_pe(BLOCK_SIZE, E)[:T]    # pe[:x.size(1)]

    ref = reference_jax(x, pe, ln_w, ln_b, wq_t, wk_t, wv_t, wo_t, H)

    # f32 compute path: tight numerical check of the kernel math (exact reciprocal path).
    out_f32 = jax.block_until_ready(
        attention_only_block(x, pe, ln_w, ln_b, wq_t, wk_t, wv_t, wo_t,
                             n_head=H, compute_dtype=jnp.float32))
    assert out_f32.shape == (B, T, E)
    assert jnp.allclose(out_f32, ref, rtol=5e-3, atol=5e-3), "f32 mismatch vs reference"

    # bf16 MXU-operand path (default, per perf guidance): looser tolerance.
    out_bf16 = jax.block_until_ready(
        attention_only_block(x, pe, ln_w, ln_b, wq_t, wk_t, wv_t, wo_t,
                             n_head=H, compute_dtype=jnp.bfloat16))
    assert out_bf16.shape == (B, T, E)
    assert jnp.allclose(out_bf16, ref, rtol=5e-2, atol=5e-2), "bf16 mismatch vs reference"

    print("KERNEL_OK")
</pallas_src>

<mosaic_0001>
module attributes {stable_mosaic.version = 11 : i64} {
  func.func @_qkv_proj_kernel(%arg0: i32, %arg1: i32, %arg2: memref<1x8x32xf32, #tpu.memory_space<vmem>>, %arg3: memref<8x96xf32, #tpu.memory_space<vmem>>, %arg4: memref<1x32xf32, #tpu.memory_space<vmem>>, %arg5: memref<1x32xf32, #tpu.memory_space<vmem>>, %arg6: memref<32x96xf32, #tpu.memory_space<vmem>>, %arg7: memref<1x4x8x8xf32, #tpu.memory_space<vmem>>, %arg8: memref<1x4x8x8xf32, #tpu.memory_space<vmem>>, %arg9: memref<1x4x8x8xf32, #tpu.memory_space<vmem>>) attributes {dimension_semantics = [#tpu.dimension_semantics<parallel>, #tpu.dimension_semantics<parallel>], iteration_bounds = array<i64: 2, 1>, scalar_prefetch = 0 : i64, scratch_operands = 0 : i64, tpu.core_type = #tpu.core_type<tc>, window_params = [{transform_indices = @transform_0, window_bounds = array<i64: 1, 8, 32>}, {transform_indices = @transform_1, window_bounds = array<i64: 8, 96>}, {pipeline_mode = #tpu.pipeline_mode<synchronous>, transform_indices = @transform_2, window_bounds = array<i64: 1, 32>}, {pipeline_mode = #tpu.pipeline_mode<synchronous>, transform_indices = @transform_3, window_bounds = array<i64: 1, 32>}, {pipeline_mode = #tpu.pipeline_mode<synchronous>, transform_indices = @transform_4, window_bounds = array<i64: 32, 96>}, {transform_indices = @transform_5, window_bounds = array<i64: 1, 4, 8, 8>}, {transform_indices = @transform_6, window_bounds = array<i64: 1, 4, 8, 8>}, {transform_indices = @transform_7, window_bounds = array<i64: 1, 4, 8, 8>}]} {
    %c0 = arith.constant 0 : index
    %c0_0 = arith.constant 0 : index
    %c0_1 = arith.constant 0 : index
    %0 = vector.load %arg2[%c0, %c0_0, %c0_1] : memref<1x8x32xf32, #tpu.memory_space<vmem>>, vector<1x8x32xf32>
    %1 = vector.shape_cast %0 : vector<1x8x32xf32> to vector<8x32xf32>
    %c0_2 = arith.constant 0 : index
    %c0_3 = arith.constant 0 : index
    %2 = vector.load %arg4[%c0_2, %c0_3] : memref<1x32xf32, #tpu.memory_space<vmem>>, vector<1x32xf32>
    %c0_4 = arith.constant 0 : index
    %c0_5 = arith.constant 0 : index
    %3 = vector.load %arg5[%c0_4, %c0_5] : memref<1x32xf32, #tpu.memory_space<vmem>>, vector<1x32xf32>
    %cst = arith.constant dense<0.000000e+00> : vector<8xf32>
    %4 = vector.multi_reduction <add>, %1, %cst [1] : vector<8x32xf32> to vector<8xf32>
    %5 = vector.shape_cast %4 : vector<8xf32> to vector<8x1xf32>
    %cst_6 = arith.constant 3.200000e+01 : f32
    %6 = vector.broadcast %cst_6 : f32 to vector<8x1xf32>
    %7 = arith.divf %5, %6 : vector<8x1xf32>
    %8 = vector.broadcast %7 : vector<8x1xf32> to vector<8x32xf32>
    %9 = arith.subf %1, %8 : vector<8x32xf32>
    %10 = arith.mulf %9, %9 : vector<8x32xf32>
    %cst_7 = arith.constant dense<0.000000e+00> : vector<8xf32>
    %11 = vector.multi_reduction <add>, %10, %cst_7 [1] : vector<8x32xf32> to vector<8xf32>
    %12 = vector.shape_cast %11 : vector<8xf32> to vector<8x1xf32>
    %cst_8 = arith.constant 3.200000e+01 : f32
    %13 = vector.broadcast %cst_8 : f32 to vector<8x1xf32>
    %14 = arith.divf %12, %13 : vector<8x1xf32>
    %cst_9 = arith.constant 9.99999974E-6 : f32
    %15 = vector.broadcast %cst_9 : f32 to vector<8x1xf32>
    %16 = arith.addf %14, %15 : vector<8x1xf32>
    %17 = math.rsqrt %16 : vector<8x1xf32>
    %18 = vector.broadcast %17 : vector<8x1xf32> to vector<8x32xf32>
    %19 = arith.mulf %9, %18 : vector<8x32xf32>
    %20 = vector.broadcast %2 : vector<1x32xf32> to vector<8x32xf32>
    %21 = arith.mulf %19, %20 : vector<8x32xf32>
    %22 = vector.broadcast %3 : vector<1x32xf32> to vector<8x32xf32>
    %23 = arith.addf %21, %22 : vector<8x32xf32>
    %c0_10 = arith.constant 0 : index
    %c0_11 = arith.constant 0 : index
    %24 = vector.load %arg6[%c0_10, %c0_11] : memref<32x96xf32, #tpu.memory_space<vmem>>, vector<32x96xf32>
    %cst_12 = arith.constant dense<0.000000e+00> : vector<8x96xf32>
    %25 = tpu.matmul %23, %24, %cst_12 {dimension_numbers = #tpu.dot_dimension_numbers<[1], [0], [0], [1], [0, 0, 1, 1], [], []>} : vector<8x32xf32>, vector<32x96xf32>, vector<8x96xf32> -> vector<8x96xf32>
    %c0_13 = arith.constant 0 : index
    %c0_14 = arith.constant 0 : index
    %26 = vector.load %arg3[%c0_13, %c0_14] : memref<8x96xf32, #tpu.memory_space<vmem>>, vector<8x96xf32>
    %27 = arith.addf %25, %26 : vector<8x96xf32>
    %28 = vector.extract_strided_slice %27 {offsets = [0, 0], sizes = [8, 32], strides = [1, 1]} : vector<8x96xf32> to vector<8x32xf32>
    %29 = vector.shape_cast %28 : vector<8x32xf32> to vector<8x4x8xf32>
    %30 = tpu.transpose %29, [1, 0, 2] : vector<8x4x8xf32> -> vector<4x8x8xf32>
    %c0_15 = arith.constant 0 : index
    %c0_16 = arith.constant 0 : index
    %c0_17 = arith.constant 0 : index
    %c0_18 = arith.constant 0 : index
    %31 = vector.load %arg7[%c0_15, %c0_16, %c0_17, %c0_18] : memref<1x4x8x8xf32, #tpu.memory_space<vmem>>, vector<1x4x8x8xf32>
    %32 = vector.shape_cast %31 : vector<1x4x8x8xf32> to vector<4x8x8xf32>
    %33 = vector.shape_cast %30 : vector<4x8x8xf32> to vector<1x4x8x8xf32>
    tpu.vector_store %arg7[%c0_15, %c0_16, %c0_17, %c0_18], %33 {strides = array<i32>} : memref<1x4x8x8xf32, #tpu.memory_space<vmem>>, vector<1x4x8x8xf32>,
    %34 = vector.extract_strided_slice %27 {offsets = [0, 32], sizes = [8, 32], strides = [1, 1]} : vector<8x96xf32> to vector<8x32xf32>
    %35 = vector.shape_cast %34 : vector<8x32xf32> to vector<8x4x8xf32>
    %36 = tpu.transpose %35, [1, 0, 2] : vector<8x4x8xf32> -> vector<4x8x8xf32>
    %c0_19 = arith.constant 0 : index
    %c0_20 = arith.constant 0 : index
    %c0_21 = arith.constant 0 : index
    %c0_22 = arith.constant 0 : index
    %37 = vector.load %arg8[%c0_19, %c0_20, %c0_21, %c0_22] : memref<1x4x8x8xf32, #tpu.memory_space<vmem>>, vector<1x4x8x8xf32>
    %38 = vector.shape_cast %37 : vector<1x4x8x8xf32> to vector<4x8x8xf32>
    %39 = vector.shape_cast %36 : vector<4x8x8xf32> to vector<1x4x8x8xf32>
    tpu.vector_store %arg8[%c0_19, %c0_20, %c0_21, %c0_22], %39 {strides = array<i32>} : memref<1x4x8x8xf32, #tpu.memory_space<vmem>>, vector<1x4x8x8xf32>,
    %40 = vector.extract_strided_slice %27 {offsets = [0, 64], sizes = [8, 32], strides = [1, 1]} : vector<8x96xf32> to vector<8x32xf32>
    %41 = vector.shape_cast %40 : vector<8x32xf32> to vector<8x4x8xf32>
    %42 = tpu.transpose %41, [1, 0, 2] : vector<8x4x8xf32> -> vector<4x8x8xf32>
    %c0_23 = arith.constant 0 : index
    %c0_24 = arith.constant 0 : index
    %c0_25 = arith.constant 0 : index
    %c0_26 = arith.constant 0 : index
    %43 = vector.load %arg9[%c0_23, %c0_24, %c0_25, %c0_26] : memref<1x4x8x8xf32, #tpu.memory_space<vmem>>, vector<1x4x8x8xf32>
    %44 = vector.shape_cast %43 : vector<1x4x8x8xf32> to vector<4x8x8xf32>
    %45 = vector.shape_cast %42 : vector<4x8x8xf32> to vector<1x4x8x8xf32>
    tpu.vector_store %arg9[%c0_23, %c0_24, %c0_25, %c0_26], %45 {strides = array<i32>} : memref<1x4x8x8xf32, #tpu.memory_space<vmem>>, vector<1x4x8x8xf32>,
    return
  }
  func.func @transform_0(%arg0: i32, %arg1: i32) -> (i32, i32, i32) {
    %c0_i32 = arith.constant 0 : i32
    %c0_i32_0 = arith.constant 0 : i32
    return %arg0, %arg1, %c0_i32 : i32, i32, i32
  }
  func.func @transform_1(%arg0: i32, %arg1: i32) -> (i32, i32) {
    %c0_i32 = arith.constant 0 : i32
    %c0_i32_0 = arith.constant 0 : i32
    return %arg1, %c0_i32 : i32, i32
  }
  func.func @transform_2(%arg0: i32, %arg1: i32) -> (i32, i32) {
    %c0_i32 = arith.constant 0 : i32
    %c0_i32_0 = arith.constant 0 : i32
    %c0_i32_1 = arith.constant 0 : i32
    return %c0_i32, %c0_i32_0 : i32, i32
  }
  func.func @transform_3(%arg0: i32, %arg1: i32) -> (i32, i32) {
    %c0_i32 = arith.constant 0 : i32
    %c0_i32_0 = arith.constant 0 : i32
    %c0_i32_1 = arith.constant 0 : i32
    return %c0_i32, %c0_i32_0 : i32, i32
  }
  func.func @transform_4(%arg0: i32, %arg1: i32) -> (i32, i32) {
    %c0_i32 = arith.constant 0 : i32
    %c0_i32_0 = arith.constant 0 : i32
    %c0_i32_1 = arith.constant 0 : i32
    return %c0_i32, %c0_i32_0 : i32, i32
  }
  func.func @transform_5(%arg0: i32, %arg1: i32) -> (i32, i32, i32, i32) {
    %c0_i32 = arith.constant 0 : i32
    %c0_i32_0 = arith.constant 0 : i32
    %c0_i32_1 = arith.constant 0 : i32
    return %arg0, %c0_i32, %arg1, %c0_i32_0 : i32, i32, i32, i32
  }
  func.func @transform_6(%arg0: i32, %arg1: i32) -> (i32, i32, i32, i32) {
    %c0_i32 = arith.constant 0 : i32
    %c0_i32_0 = arith.constant 0 : i32
    %c0_i32_1 = arith.constant 0 : i32
    return %arg0, %c0_i32, %arg1, %c0_i32_0 : i32, i32, i32, i32
  }
  func.func @transform_7(%arg0: i32, %arg1: i32) -> (i32, i32, i32, i32) {
    %c0_i32 = arith.constant 0 : i32
    %c0_i32_0 = arith.constant 0 : i32
    %c0_i32_1 = arith.constant 0 : i32
    return %arg0, %c0_i32, %arg1, %c0_i32_0 : i32, i32, i32, i32
  }
}

</mosaic_0001>

<llo_original>
// kernel: tpu_custom_call.1
$region0: #{tpu_custom_call.1}
  #allocation0 [shape = 'u32[]', space=smem, size = 0x4, offset = 0x4, fixed_abs, tag = 'smem constant byte address 0x4 - core index']
  #allocation1 [shape = 'u32[144,128]{1,0:T(1,128)}', space=vmem, size = 0x12000, scoped, tag = 'internal scratch']
  %s0 = inlined_call_operand.hbm [shape: f32[2,8,32], index: 0, kind: input, shape index: {}]
  %s1 = inlined_call_operand.hbm [shape: f32[8,96], index: 1, kind: input, shape index: {}]
  %s2 = inlined_call_operand.vmem [shape: f32[1,32], index: 2, kind: input, shape index: {}]
  %s3 = inlined_call_operand.vmem [shape: f32[1,32], index: 3, kind: input, shape index: {}]
  %s4 = inlined_call_operand.hbm [shape: f32[32,96], index: 4, kind: input, shape index: {}]
  %s5 = inlined_call_operand.hbm [shape: f32[2,4,8,8], index: 5, kind: output, shape index: {0}]
  %s6 = inlined_call_operand.hbm [shape: f32[2,4,8,8], index: 6, kind: output, shape index: {1}]
  %s7 = inlined_call_operand.hbm [shape: f32[2,4,8,8], index: 7, kind: output, shape index: {2}]
  %8 = xla_tuple %s5, %s6, %s7
  %s9 = sld [smem:[#allocation0]]
  $region81: #{tpu_custom_call.1} parent=0
    _
  %s11 = ssub.s32 1, %s9
  %s12 = scalar_select 0, %s11, %s9
  $region1: #{tpu_custom_call.1} parent=0
    #allocation2 [shape = 'u8[8192]{0}', space=vmem, size = 0x2000, scoped, tag = 'input window, operand 0']
    #allocation3 [shape = 's32[2]{0}', space=sflag, size = 0x8, scoped, tag = 'scoped memory for tpu_custom_call.1']
    #allocation4 [shape = 's32[2]{0}', space=sflag, size = 0x8, scoped, tag = 'scoped memory for tpu_custom_call.1']
    #allocation5 [shape = 'u8[4096]{0}', space=vmem, size = 0x1000, scoped, tag = 'input window, operand 1, single buffered']
    #allocation6 [shape = 's32[1]{0}', space=sflag, size = 0x4, scoped, tag = 'scoped memory for tpu_custom_call.1']
    #allocation7 [shape = 'u8[16384]{0}', space=vmem, size = 0x4000, scoped, tag = 'input window, operand 4, single buffered']
    #allocation8 [shape = 'u8[32768]{0}', space=vmem, size = 0x8000, scoped, tag = 'output window, operand 0']
    #allocation9 [shape = 'u8[32768]{0}', space=vmem, size = 0x8000, scoped, tag = 'output window, operand 1']
    #allocation10 [shape = 's32[2]{0}', space=sflag, size = 0x8, scoped, tag = 'scoped memory for tpu_custom_call.1']
    #allocation11 [shape = 'u8[32768]{0}', space=vmem, size = 0x8000, scoped, tag = 'output window, operand 2']
    %13 = vsyncpa [#allocation3], 0
    %s14 = scalar_lea.sflag [#allocation3], 1
    %15 = vsyncpa %s14, 0
    %16 = vsyncpa [#allocation6], 0
    %17 = vsyncpa [#allocation4], 0
    %s18 = scalar_lea.sflag [#allocation4], 1
    %19 = vsyncpa %s18, 0
    %20 = vsyncpa [#allocation10], 0
    %s21 = scalar_lea.sflag [#allocation10], 1
    %22 = vsyncpa %s21, 0
    loop: start=0, step=1, limit=4
    $region2: #{tpu_custom_call.1} parent=1 // loop_pre_header
      _
    $region3: #{tpu_custom_call.1} parent=1 // loop_header
      %s24 = sphi 0, %s28
      %p25 = scmp.ge.s32.totalorder %s24, 4
      %s31 = sphi 0, %s43
      %s32 = sphi 0, %s39
      %s33 = sphi 0, %s31
      %s34 = sphi 0, %s32
      %s35 = sphi 0, %s33
      %s36 = sphi 0, %s34
      %s48 = sphi 0, %s50
      %s51 = sphi 0, %s48
      %s52 = sphi 0, %s51
      %s68 = sphi 0, %s52
      %s74 = sphi 0, %s76
      %s77 = sphi 0, %s74
      %s78 = sphi 0, %s77
      %s94 = sphi 0, %s78
      %s98 = sphi 0, %s98
      %s100 = sphi 0, %s98
      %s101 = sphi 0, %s100
      %s115 = sphi 0, %s101
      %s119 = sphi 0, %s119
      %s121 = sphi 0, %s119
      %s122 = sphi 0, %s121
      %s136 = sphi 0, %s122
      %s140 = sphi 0, %s140
      %s142 = sphi 0, %s140
      %s143 = sphi 0, %s142
      %s157 = sphi 0, %s143
      %s165 = sphi 0, %s167
      %s168 = sphi 0, %s165
      %s169 = sphi 0, %s168
      %s185 = sphi 0, %s169
      %s193 = sphi 0, %s195
      %s196 = sphi 0, %s193
      %s197 = sphi 0, %s196
      %s213 = sphi 0, %s197
      %s221 = sphi 0, %s223
      %s224 = sphi 0, %s221
      %s225 = sphi 0, %s224
      %s241 = sphi 0, %s225
    $region4: #{tpu_custom_call.1} parent=1 // loop_header_branch
      %27 = sbr.rel (%p25) target = $region8
    $region5: #{tpu_custom_call.1} parent=1 // loop_body
      %s29 = ssub.s32 %s24, 1
      %s30 = ssub.s32 %s24, 2
      %s37 = sadd.s32 1, %s32
      %p38 = scmp.ge.s32.totalorder %s37, 1
      %s39 = scalar_select %p38, 0, %s37
      %s40 = sadd.s32 1, %s31
      %s41 = scalar_select %p38, %s40, %s31
      %p42 = scmp.ge.s32.totalorder %s41, 2
      %s43 = scalar_select %p42, 0, %s41
      %s44 = ssub.s32 %s31, %s43
      %s45 = ssub.s32 %s32, %s39
      %s46 = sor.u32 %s44, %s45
      %p47 = scmp.eq.s32.totalorder %s46, 0
      %s49 = sadd.s32 %s48, 1
      %s50 = scalar_select %p47, %s48, %s49
      %p53 = pneg %p47
      %p54 = scmp.eq.s32.totalorder %s24, 1
      %p55 = por %p53, %p54
      %p56 = scmp.ne.s32.totalorder %s48, %s51
      %p57 = scmp.eq.s32.totalorder %s24, 0
      %p58 = por %p56, %p57
      %p59 = scmp.ne.s32.totalorder %s48, %s51
      %p60 = scmp.eq.s32.totalorder %s29, 1
      %p61 = por %p59, %p60
      %p62 = scmp.ne.s32.totalorder %s51, %s52
      %p63 = scmp.eq.s32.totalorder %s29, 0
      %p64 = por %p62, %p63
      %p65 = scmp.ne.s32.totalorder %s51, %s52
      %p66 = scmp.eq.s32.totalorder %s30, 1
      %p67 = por %p65, %p66
      %p69 = scmp.ne.s32.totalorder %s52, %s68
      %p70 = scmp.eq.s32.totalorder %s30, 0
      %p71 = por %p69, %p70
      %s72 = ssub.s32 %s32, %s39
      %p73 = scmp.eq.s32.totalorder %s72, 0
      %s75 = sadd.s32 %s74, 1
      %s76 = scalar_select %p73, %s74, %s75
      %p79 = pneg %p73
      %p80 = scmp.eq.s32.totalorder %s24, 1
      %p81 = por %p79, %p80
      %p82 = scmp.ne.s32.totalorder %s74, %s77
      %p83 = scmp.eq.s32.totalorder %s24, 0
      %p84 = por %p82, %p83
      %p85 = scmp.ne.s32.totalorder %s74, %s77
      %p86 = scmp.eq.s32.totalorder %s29, 1
      %p87 = por %p85, %p86
      %p88 = scmp.ne.s32.totalorder %s77, %s78
      %p89 = scmp.eq.s32.totalorder %s29, 0
      %p90 = por %p88, %p89
      %p91 = scmp.ne.s32.totalorder %s77, %s78
      %p92 = scmp.eq.s32.totalorder %s30, 1
      %p93 = por %p91, %p92
      %p95 = scmp.ne.s32.totalorder %s78, %s94
      %p96 = scmp.eq.s32.totalorder %s30, 0
      %p97 = por %p95, %p96
      %s99 = sadd.s32 %s98, 1
      %p102 = scmp.eq.s32.totalorder %s24, 1
      %p103 = scmp.ne.s32.totalorder %s98, %s100
      %p104 = scmp.eq.s32.totalorder %s24, 0
      %p105 = por %p103, %p104
      %p106 = scmp.ne.s32.totalorder %s98, %s100
      %p107 = scmp.eq.s32.totalorder %s29, 1
      %p108 = por %p106, %p107
      %p109 = scmp.ne.s32.totalorder %s100, %s101
      %p110 = scmp.eq.s32.totalorder %s29, 0
      %p111 = por %p109, %p110
      %p112 = scmp.ne.s32.totalorder %s100, %s101
      %p113 = scmp.eq.s32.totalorder %s30, 1
      %p114 = por %p112, %p113
      %p116 = scmp.ne.s32.totalorder %s101, %s115
      %p117 = scmp.eq.s32.totalorder %s30, 0
      %p118 = por %p116, %p117
      %s120 = sadd.s32 %s119, 1
      %p123 = scmp.eq.s32.totalorder %s24, 1
      %p124 = scmp.ne.s32.totalorder %s119, %s121
      %p125 = scmp.eq.s32.totalorder %s24, 0
      %p126 = por %p124, %p125
      %p127 = scmp.ne.s32.totalorder %s119, %s121
      %p128 = scmp.eq.s32.totalorder %s29, 1
      %p129 = por %p127, %p128
      %p130 = scmp.ne.s32.totalorder %s121, %s122
      %p131 = scmp.eq.s32.totalorder %s29, 0
      %p132 = por %p130, %p131
      %p133 = scmp.ne.s32.totalorder %s121, %s122
      %p134 = scmp.eq.s32.totalorder %s30, 1
      %p135 = por %p133, %p134
      %p137 = scmp.ne.s32.totalorder %s122, %s136
      %p138 = scmp.eq.s32.totalorder %s30, 0
      %p139 = por %p137, %p138
      %s141 = sadd.s32 %s140, 1
      %p144 = scmp.eq.s32.totalorder %s24, 1
      %p145 = scmp.ne.s32.totalorder %s140, %s142
      %p146 = scmp.eq.s32.totalorder %s24, 0
      %p147 = por %p145, %p146
      %p148 = scmp.ne.s32.totalorder %s140, %s142
      %p149 = scmp.eq.s32.totalorder %s29, 1
      %p150 = por %p148, %p149
      %p151 = scmp.ne.s32.totalorder %s142, %s143
      %p152 = scmp.eq.s32.totalorder %s29, 0
      %p153 = por %p151, %p152
      %p154 = scmp.ne.s32.totalorder %s142, %s143
      %p155 = scmp.eq.s32.totalorder %s30, 1
      %p156 = por %p154, %p155
      %p158 = scmp.ne.s32.totalorder %s143, %s157
      %p159 = scmp.eq.s32.totalorder %s30, 0
      %p160 = por %p158, %p159
      %s161 = ssub.s32 %s31, %s43
      %s162 = ssub.s32 %s32, %s39
      %s163 = sor.u32 %s161, %s162
      %p164 = scmp.eq.s32.totalorder %s163, 0
      %s166 = sadd.s32 %s165, 1
      %s167 = scalar_select %p164, %s165, %s166
      %p170 = pneg %p164
      %p171 = scmp.eq.s32.totalorder %s24, 1
      %p172 = por %p170, %p171
      %p173 = scmp.ne.s32.totalorder %s165, %s168
      %p174 = scmp.eq.s32.totalorder %s24, 0
      %p175 = por %p173, %p174
      %p176 = scmp.ne.s32.totalorder %s165, %s168
      %p177 = scmp.eq.s32.totalorder %s29, 1
      %p178 = por %p176, %p177
      %p179 = scmp.ne.s32.totalorder %s168, %s169
      %p180 = scmp.eq.s32.totalorder %s29, 0
      %p181 = por %p179, %p180
      %p182 = scmp.ne.s32.totalorder %s168, %s169
      %p183 = scmp.eq.s32.totalorder %s30, 1
      %p184 = por %p182, %p183
      %p186 = scmp.ne.s32.totalorder %s169, %s185
      %p187 = scmp.eq.s32.totalorder %s30, 0
      %p188 = por %p186, %p187
      %s189 = ssub.s32 %s31, %s43
      %s190 = ssub.s32 %s32, %s39
      %s191 = sor.u32 %s189, %s190
      %p192 = scmp.eq.s32.totalorder %s191, 0
      %s194 = sadd.s32 %s193, 1
      %s195 = scalar_select %p192, %s193, %s194
      %p198 = pneg %p192
      %p199 = scmp.eq.s32.totalorder %s24, 1
      %p200 = por %p198, %p199
      %p201 = scmp.ne.s32.totalorder %s193, %s196
      %p202 = scmp.eq.s32.totalorder %s24, 0
      %p203 = por %p201, %p202
      %p204 = scmp.ne.s32.totalorder %s193, %s196
      %p205 = scmp.eq.s32.totalorder %s29, 1
      %p206 = por %p204, %p205
      %p207 = scmp.ne.s32.totalorder %s196, %s197
      %p208 = scmp.eq.s32.totalorder %s29, 0
      %p209 = por %p207, %p208
      %p210 = scmp.ne.s32.totalorder %s196, %s197
      %p211 = scmp.eq.s32.totalorder %s30, 1
      %p212 = por %p210, %p211
      %p214 = scmp.ne.s32.totalorder %s197, %s213
      %p215 = scmp.eq.s32.totalorder %s30, 0
      %p216 = por %p214, %p215
      %s217 = ssub.s32 %s31, %s43
      %s218 = ssub.s32 %s32, %s39
      %s219 = sor.u32 %s217, %s218
      %p220 = scmp.eq.s32.totalorder %s219, 0
      %s222 = sadd.s32 %s221, 1
      %s223 = scalar_select %p220, %s221, %s222
      %p226 = pneg %p220
      %p227 = scmp.eq.s32.totalorder %s24, 1
      %p228 = por %p226, %p227
      %p229 = scmp.ne.s32.totalorder %s221, %s224
      %p230 = scmp.eq.s32.totalorder %s24, 0
      %p231 = por %p229, %p230
      %p232 = scmp.ne.s32.totalorder %s221, %s224
      %p233 = scmp.eq.s32.totalorder %s29, 1
      %p234 = por %p232, %p233
      %p235 = scmp.ne.s32.totalorder %s224, %s225
      %p236 = scmp.eq.s32.totalorder %s29, 0
      %p237 = por %p235, %p236
      %p238 = scmp.ne.s32.totalorder %s224, %s225
      %p239 = scmp.eq.s32.totalorder %s30, 1
      %p240 = por %p238, %p239
      %p242 = scmp.ne.s32.totalorder %s225, %s241
      %p243 = scmp.eq.s32.totalorder %s30, 0
      %p244 = por %p242, %p243
      %p245 = scmp.le.s32.totalorder 1, %s24
      %p246 = scmp.lt.s32.totalorder %s24, 3
      %p247 = pnand %p245, %p246
      %p248 = pneg %p247
      // Predicated region
      $region9: #{tpu_custom_call.1} parent=5 // pred_check
        _
      $region10: #{tpu_custom_call.1} parent=5 // pred_check_branch
        %250 = sbr.rel (%p247) target = $region12
      $region11: #{tpu_custom_call.1} parent=5 // pred_region
        %s251 = ssub.s32 %s24, 1
        // Predicated region
        $region13: #{tpu_custom_call.1} parent=11 // pred_check
          %p252 = pneg %p90
        $region14: #{tpu_custom_call.1} parent=11 // pred_check_branch
          %254 = sbr.rel (%p252) target = $region16
        $region15: #{tpu_custom_call.1} parent=11 // pred_region
          %s256 = ssub.s32 128, 128
          %257 = vsyncadd [#allocation6], %s256
          %s258 = smul.addr %s34, 128
          %s259 = scalar_lea.hbm %s1, %s258
          %s261 = sshll.u32 [#allocation5], 4
          %s262 = int_to_ptr.vmem [resolvable:$true] %s261
          %264 = dma.hbm_to_vmem [thread:$0]  %s259, 128, %s262, [#allocation6]
        $region16: #{tpu_custom_call.1} parent=11 // pred_fallthru
          _
        // Predicated region
        $region17: #{tpu_custom_call.1} parent=11 // pred_check
          %p265 = pneg %p111
        $region18: #{tpu_custom_call.1} parent=11 // pred_check_branch
          %267 = sbr.rel (%p265) target = $region20
        $region19: #{tpu_custom_call.1} parent=11 // pred_region
          _
        $region20: #{tpu_custom_call.1} parent=11 // pred_fallthru
          _
        // Predicated region
        $region21: #{tpu_custom_call.1} parent=11 // pred_check
          %p268 = pneg %p132
        $region22: #{tpu_custom_call.1} parent=11 // pred_check_branch
          %270 = sbr.rel (%p268) target = $region24
        $region23: #{tpu_custom_call.1} parent=11 // pred_region
          _
        $region24: #{tpu_custom_call.1} parent=11 // pred_fallthru
          _
        // Predicated region
        $region25: #{tpu_custom_call.1} parent=11 // pred_check
          %p271 = pneg %p153
        $region26: #{tpu_custom_call.1} parent=11 // pred_check_branch
          %273 = sbr.rel (%p271) target = $region28
        $region27: #{tpu_custom_call.1} parent=11 // pred_region
          %s275 = ssub.s32 512, 512
          %276 = vsyncadd [#allocation6], %s275
          %s277 = sshll.u32 [#allocation7], 4
          %s278 = int_to_ptr.vmem [resolvable:$true] %s277
          %283 = dma.hbm_to_vmem [thread:$0]  %s4, 512, %s278, [#allocation6], 128, 128, 8
        $region28: #{tpu_custom_call.1} parent=11 // pred_fallthru
          _
      $region12: #{tpu_custom_call.1} parent=5 // pred_fallthru
        _
      %p284 = scmp.lt.s32.totalorder %s24, 2
      // Predicated region
      $region29: #{tpu_custom_call.1} parent=5 // pred_check
        %p285 = pneg %p284
      $region30: #{tpu_custom_call.1} parent=5 // pred_check_branch
        %287 = sbr.rel (%p285) target = $region32
      $region31: #{tpu_custom_call.1} parent=5 // pred_region
        // Predicated region
        $region33: #{tpu_custom_call.1} parent=31 // pred_check
          %p288 = pneg %p58
        $region34: #{tpu_custom_call.1} parent=31 // pred_check_branch
          %290 = sbr.rel (%p288) target = $region36
        $region35: #{tpu_custom_call.1} parent=31 // pred_region
          %s291 = sand.u32 %s48, 1
          %s292 = scalar_lea.sflag [#allocation3], %s291
          %s293 = sand.u32 %s48, 1
          %s294 = smul.addr %s293, 8
          %s295 = scalar_lea.vmem [#allocation2], %s294
          %s297 = ssub.s32 128, 128
          %298 = vsyncadd %s292, %s297
          %s299 = sadd.s32 %s32, %s31
          %s300 = smul.addr %s299, 128
          %s301 = scalar_lea.hbm %s0, %s300
          %s303 = sshll.u32 %s295, 4
          %s304 = int_to_ptr.vmem [resolvable:$true] %s303
          %306 = dma.hbm_to_vmem [thread:$0]  %s301, 128, %s304, %s292
        $region36: #{tpu_custom_call.1} parent=31 // pred_fallthru
          _
      $region32: #{tpu_custom_call.1} parent=5 // pred_fallthru
        _
      %p307 = scmp.le.s32.totalorder 1, %s24
      %p308 = scmp.lt.s32.totalorder %s24, 3
      %p309 = pnand %p307, %p308
      %p310 = pneg %p309
      // Predicated region
      $region37: #{tpu_custom_call.1} parent=5 // pred_check
        _
      $region38: #{tpu_custom_call.1} parent=5 // pred_check_branch
        %312 = sbr.rel (%p309) target = $region40
      $region39: #{tpu_custom_call.1} parent=5 // pred_region
        %s313 = ssub.s32 %s24, 1
        %s314 = sand.u32 %s51, 1
        %s315 = scalar_lea.sflag [#allocation3], %s314
        %s316 = sand.u32 %s51, 1
        %s317 = smul.addr %s316, 8
        %s318 = scalar_lea.vmem [#allocation2], %s317
        // Predicated region
        $region41: #{tpu_custom_call.1} parent=39 // pred_check
          %p319 = pneg %p64
        $region42: #{tpu_custom_call.1} parent=39 // pred_check_branch
          %321 = sbr.rel (%p319) target = $region44
        $region43: #{tpu_custom_call.1} parent=39 // pred_region
          %322 = dma.done %s315, 128
        $region44: #{tpu_custom_call.1} parent=39 // pred_fallthru
          _
        // Predicated region
        $region45: #{tpu_custom_call.1} parent=39 // pred_check
          %p323 = pneg %p90
        $region46: #{tpu_custom_call.1} parent=39 // pred_check_branch
          %325 = sbr.rel (%p323) target = $region48
        $region47: #{tpu_custom_call.1} parent=39 // pred_region
          %326 = dma.done [#allocation6], 128
        $region48: #{tpu_custom_call.1} parent=39 // pred_fallthru
          _
        // Predicated region
        $region49: #{tpu_custom_call.1} parent=39 // pred_check
          %p327 = pneg %p153
        $region50: #{tpu_custom_call.1} parent=39 // pred_check_branch
          %329 = sbr.rel (%p327) target = $region52
        $region51: #{tpu_custom_call.1} parent=39 // pred_region
          %330 = dma.done [#allocation6], 512
        $region52: #{tpu_custom_call.1} parent=39 // pred_fallthru
          _
        %s331 = sand.u32 %s51, 1
        %s332 = scalar_lea.sflag [#allocation3], %s331
        %s333 = sand.u32 %s51, 1
        %s334 = smul.addr %s333, 8
        %s335 = scalar_lea.vmem [#allocation2], %s334
        %p336 = pneg %p64
        %p337 = pneg %p61
        %p338 = pneg %p90
        %p339 = pneg %p87
        %p340 = pneg %p111
        %p341 = pneg %p108
        %p342 = pneg %p132
        %p343 = pneg %p129
        %p344 = pneg %p153
        %p345 = pneg %p150
        %p346 = pneg %p181
        %p347 = pneg %p178
        %s348 = sand.u32 %s168, 1
        %s349 = scalar_lea.sflag [#allocation4], %s348
        %s350 = sand.u32 %s168, 1
        %s351 = smul.addr %s350, 32
        %s352 = scalar_lea.vmem [#allocation8], %s351
        %p353 = pneg %p209
        %p354 = pneg %p206
        %s355 = sand.u32 %s29, 1
        %s356 = scalar_lea.sflag [#allocation10], %s355
        %s357 = sand.u32 %s196, 1
        %s358 = smul.addr %s357, 32
        %s359 = scalar_lea.vmem [#allocation9], %s358
        %p360 = pneg %p237
        %p361 = pneg %p234
        %s362 = sand.u32 %s29, 1
        %s363 = scalar_lea.sflag [#allocation10], %s362
        %s364 = sand.u32 %s224, 1
        %s365 = smul.addr %s364, 32
        %s366 = scalar_lea.vmem [#allocation11], %s365
        %v367 = vld [vmem:[%s318] sm:$0xff]
        %v368 = vld [vmem:[%s2] sm:$0x1]
        %v369 = vld [vmem:[%s3] sm:$0x1]
        %vm370 = vcmask 261120
        %v371 = vsel %vm370, %v367, 0.0
        %372 = vadd.xlane.f32.xlu0 %v371
        %v373 = vpop.xlane.xlu0 %372
        %v374 = vrcp.pop 32.0
        %v375 = vmul.f32 %v373, %v374
        %v376 = vsub.f32 %v367, %v375
        %v377 = vmul.f32 %v376, %v376
        %v378 = vsel %vm370, %v377, 0.0
        %379 = vadd.xlane.f32.xlu0 %v378
        %v380 = vpop.xlane.xlu0 %379
        %v381 = vmul.f32 %v380, %v374
        %v382 = vadd.f32 %v381, 1e-05
        %v383 = vrsqrt.pop %v382
        %v384 = vmul.f32 %v376, %v383
        %v386 = vlaneseq
        %v387 = vshrl.u32 %v386, 7
        %v388 = vsub.s32 0, %v387
        %v389 = vrot.slane %v368, %v388
        %v391 = vmul.f32 %v384, %v389
        %v393 = vlaneseq
        %v394 = vshrl.u32 %v393, 7
        %v395 = vsub.s32 0, %v394
        %v396 = vrot.slane %v369, %v395
        %v398 = vadd.f32 %v391, %v396
        %v399 = vld [vmem:[#allocation7] sm:$0xff]
        %v400 = vld [vmem:[#allocation7 + $0x8] sm:$0xff]
        %v401 = vld [vmem:[#allocation7 + $0x10] sm:$0xff]
        %v402 = vld [vmem:[#allocation7 + $0x18] sm:$0xff]
        %v403 = vld [vmem:[#allocation5] sm:$0xff]
        %v405 = vsel %vm370, %v398, 0
        %407 = vmatprep.subr.mxu0 0.0
        %408 = vmatpush1.msra.mxu0 %v399
        %409 = vmatprep.subr.mxu0 0.0
        %410 = vmatpush1.msra.mxu0 %v400
        %411 = vmatprep.subr.mxu0 0.0
        %412 = vmatpush1.msra.mxu0 %v401
        %413 = vmatprep.subr.mxu0 0.0
        %414 = vmatpush1.msra.mxu0 %v402
        %415 = vmatprep.subr.mxu0 0.0
        %416 = vmatpush1.msra.mxu0 0.0
        %417 = vmatprep.subr.mxu0 0.0
        %418 = vmatpush1.msra.mxu0 0.0
        %419 = vmatprep.subr.mxu0 0.0
        %420 = vmatpush1.msra.mxu0 0.0
        %421 = vmatprep.subr.mxu0 0.0
        %422 = vmatpush1.msra.mxu0 0.0
        %423 = vmatprep.subr.mxu0 0.0
        %424 = vmatpush1.msra.mxu0 0.0
        %425 = vmatprep.subr.mxu0 0.0
        %426 = vmatpush1.msra.mxu0 0.0
        %427 = vmatprep.subr.mxu0 0.0
        %428 = vmatpush1.msra.mxu0 0.0
        %429 = vmatprep.subr.mxu0 0.0
        %430 = vmatpush1.msra.mxu0 0.0
        %431 = vmatprep.subr.mxu0 0.0
        %432 = vmatpush1.msra.mxu0 0.0
        %433 = vmatprep.subr.mxu0 0.0
        %434 = vmatpush1.msra.mxu0 0.0
        %435 = vmatprep.subr.mxu0 0.0
        %436 = vmatpush1.msra.mxu0 0.0
        %437 = vmatprep.subr.mxu0 0.0
        %438 = vmatpush1.msra.mxu0 0.0
        %439 = vmatprep.subr.mxu0 0.0
        %440 = vmatpush1.msra.mxu0 0.0
        %441 = vmatprep.subr.mxu0 0.0
        %442 = vmatpush1.msra.mxu0 0.0
        %443 = vmatprep.subr.mxu0 0.0
        %444 = vmatpush1.msra.mxu0 0.0
        %445 = vmatprep.subr.mxu0 0.0
        %446 = vmatpush1.msra.mxu0 0.0
        %447 = vmatprep.subr.mxu0 0.0
        %448 = vmatpush1.msra.mxu0 0.0
        %449 = vmatprep.subr.mxu0 0.0
        %450 = vmatpush1.msra.mxu0 0.0
        %451 = vmatprep.subr.mxu0 0.0
        %452 = vmatpush1.msra.mxu0 0.0
        %453 = vmatprep.subr.mxu0 0.0
        %454 = vmatpush1.msra.mxu0 0.0
        %455 = vmatprep.subr.mxu0 0.0
        %456 = vmatpush1.msra.mxu0 0.0
        %457 = vmatprep.subr.mxu0 0.0
        %458 = vmatpush1.msra.mxu0 0.0
        %459 = vmatprep.subr.mxu0 0.0
        %460 = vmatpush1.msra.mxu0 0.0
        %461 = vmatprep.subr.mxu0 0.0
        %462 = vmatpush1.msra.mxu0 0.0
        %463 = vmatprep.subr.mxu0 0.0
        %464 = vmatpush1.msra.mxu0 0.0
        %465 = vmatprep.subr.mxu0 0.0
        %466 = vmatpush1.msra.mxu0 0.0
        %467 = vmatprep.subr.mxu0 0.0
        %468 = vmatpush1.msra.mxu0 0.0
        %469 = vmatprep.subr.mxu0 0.0
        %470 = vmatpush1.msra.mxu0 0.0
        %471 = vmatprep.mubr.f32.mxu0 0.0
        %472 = vmatmul.mubr.f32.gmra.mrb[0].mxu0 %v405
        %v473 = vpop.f32.mrb[0].mxu0
        %v474 = vadd.f32 %v403, %v473
        %v475 = vpop.f32.mrb[0].mxu0
        %476 = vdwg.mxu0
        %478 = vrot.lane.b32.xlu0 %v474, 120
        %v479 = vpop.permute.xlu0 %478
        %481 = vrot.lane.b32.xlu0 %v474, 112
        %v482 = vpop.permute.xlu0 %481
        %484 = vrot.lane.b32.xlu0 %v474, 104
        %v485 = vpop.permute.xlu0 %484
        %v487 = vcombine.low %v474, %v482
        %v488 = vcombine.high %v474, %v482
        %v490 = vunpack.c.l.s4 1983009808
        %v491 = vunpack.c.0.s8 %v490
        %v492 = vlaneseq
        %v493 = vshrl.u32 %v492, 7
        %v494 = vsub.s32 %v491, %v493
        %v495 = vrot.slane %v487, %v494
        %v497 = vunpack.c.l.s4 1983009808
        %v498 = vunpack.c.0.s8 %v497
        %v499 = vlaneseq
        %v500 = vshrl.u32 %v499, 7
        %v501 = vsub.s32 %v498, %v500
        %v502 = vrot.slane %v488, %v501
        %v503 = vcombine.low %v479, %v485
        %v504 = vcombine.high %v479, %v485
        %v506 = vunpack.c.l.s4 1983009808
        %v507 = vunpack.c.0.s8 %v506
        %v508 = vlaneseq
        %v509 = vshrl.u32 %v508, 7
        %v510 = vsub.s32 %v507, %v509
        %v511 = vrot.slane %v503, %v510
        %v513 = vunpack.c.l.s4 1983009808
        %v514 = vunpack.c.0.s8 %v513
        %v515 = vlaneseq
        %v516 = vshrl.u32 %v515, 7
        %v517 = vsub.s32 %v514, %v516
        %v518 = vrot.slane %v504, %v517
        %v519 = vcombine.low %v495, %v511
        %v520 = vcombine.high %v495, %v511
        %v522 = vunpack.c.l.s4 1934713408
        %v523 = vunpack.c.0.s8 %v522
        %v524 = vlaneseq
        %v525 = vshrl.u32 %v524, 7
        %v526 = vsub.s32 %v523, %v525
        %v527 = vrot.slane %v519, %v526
        %v529 = vunpack.c.l.s4 1934713408
        %v530 = vunpack.c.0.s8 %v529
        %v531 = vlaneseq
        %v532 = vshrl.u32 %v531, 7
        %v533 = vsub.s32 %v530, %v532
        %v534 = vrot.slane %v520, %v533
        %v535 = vcombine.low %v502, %v518
        %v536 = vcombine.high %v502, %v518
        %v538 = vunpack.c.l.s4 1934713408
        %v539 = vunpack.c.0.s8 %v538
        %v540 = vlaneseq
        %v541 = vshrl.u32 %v540, 7
        %v542 = vsub.s32 %v539, %v541
        %v543 = vrot.slane %v535, %v542
        %v545 = vunpack.c.l.s4 1934713408
        %v546 = vunpack.c.0.s8 %v545
        %v547 = vlaneseq
        %v548 = vshrl.u32 %v547, 7
        %v549 = vsub.s32 %v546, %v548
        %v550 = vrot.slane %v536, %v549
        %v551 = vcombine.high %v527, 0.0
        %v552 = vcombine.high %v534, 0.0
        %v553 = vcombine.high %v543, 0.0
        %v554 = vcombine.high %v550, 0.0
        %v555 = vcombine.low %v527, %v534
        %v557 = vunpack.c.l.s4 1983009808
        %v558 = vunpack.c.0.s8 %v557
        %v559 = vlaneseq
        %v560 = vshrl.u32 %v559, 7
        %v561 = vsub.s32 %v558, %v560
        %v562 = vrot.slane %v555, %v561
        %v563 = vcombine.low %v551, %v552
        %v565 = vunpack.c.l.s4 1983009808
        %v566 = vunpack.c.0.s8 %v565
        %v567 = vlaneseq
        %v568 = vshrl.u32 %v567, 7
        %v569 = vsub.s32 %v566, %v568
        %v570 = vrot.slane %v563, %v569
        %v571 = vcombine.low %v543, %v550
        %v573 = vunpack.c.l.s4 1983009808
        %v574 = vunpack.c.0.s8 %v573
        %v575 = vlaneseq
        %v576 = vshrl.u32 %v575, 7
        %v577 = vsub.s32 %v574, %v576
        %v578 = vrot.slane %v571, %v577
        %v579 = vcombine.low %v553, %v554
        %v581 = vunpack.c.l.s4 1983009808
        %v582 = vunpack.c.0.s8 %v581
        %v583 = vlaneseq
        %v584 = vshrl.u32 %v583, 7
        %v585 = vsub.s32 %v582, %v584
        %v586 = vrot.slane %v579, %v585
        %v587 = vcombine.low %v562, %v570
        %v588 = vcombine.high %v562, %v570
        %v590 = vunpack.c.l.s4 1934713408
        %v591 = vunpack.c.0.s8 %v590
        %v592 = vlaneseq
        %v593 = vshrl.u32 %v592, 7
        %v594 = vsub.s32 %v591, %v593
        %v595 = vrot.slane %v587, %v594
        %v597 = vunpack.c.l.s4 1934713408
        %v598 = vunpack.c.0.s8 %v597
        %v599 = vlaneseq
        %v600 = vshrl.u32 %v599, 7
        %v601 = vsub.s32 %v598, %v600
        %v602 = vrot.slane %v588, %v601
        %v603 = vcombine.low %v578, %v586
        %v604 = vcombine.high %v578, %v586
        %v606 = vunpack.c.l.s4 1934713408
        %v607 = vunpack.c.0.s8 %v606
        %v608 = vlaneseq
        %v609 = vshrl.u32 %v608, 7
        %v610 = vsub.s32 %v607, %v609
        %v611 = vrot.slane %v603, %v610
        %v613 = vunpack.c.l.s4 1934713408
        %v614 = vunpack.c.0.s8 %v613
        %v615 = vlaneseq
        %v616 = vshrl.u32 %v615, 7
        %v617 = vsub.s32 %v614, %v616
        %v618 = vrot.slane %v604, %v617
        %v619 = vcombine.low %v595, %v611
        %v620 = vcombine.high %v595, %v611
        %v621 = vcombine.low %v602, %v618
        %v622 = vcombine.high %v602, %v618
        %vm623 = vcmask 64512
        %624 = vst.msk [vmem:[%s352] sm:$0xff] %vm623, %v619
        %625 = vst.msk [vmem:[%s352 + $0x8] sm:$0xff] %vm623, %v620
        %626 = vst.msk [vmem:[%s352 + $0x10] sm:$0xff] %vm623, %v621
        %627 = vst.msk [vmem:[%s352 + $0x18] sm:$0xff] %vm623, %v622
        %628 = vrot.lane.b32.xlu0 %v474, 96
        %v629 = vpop.permute.xlu0 %628
        %630 = vrot.lane.b32.xlu0 %v479, 96
        %v631 = vpop.permute.xlu0 %630
        %632 = vrot.lane.b32.xlu0 %v482, 96
        %v633 = vpop.permute.xlu0 %632
        %634 = vrot.lane.b32.xlu0 %v485, 96
        %v635 = vpop.permute.xlu0 %634
        %v640 = vcombine.low %v629, %v633
        %v641 = vcombine.high %v629, %v633
        %v643 = vunpack.c.l.s4 1983009808
        %v644 = vunpack.c.0.s8 %v643
        %v645 = vlaneseq
        %v646 = vshrl.u32 %v645, 7
        %v647 = vsub.s32 %v644, %v646
        %v648 = vrot.slane %v640, %v647
        %v650 = vunpack.c.l.s4 1983009808
        %v651 = vunpack.c.0.s8 %v650
        %v652 = vlaneseq
        %v653 = vshrl.u32 %v652, 7
        %v654 = vsub.s32 %v651, %v653
        %v655 = vrot.slane %v641, %v654
        %v656 = vcombine.low %v631, %v635
        %v657 = vcombine.high %v631, %v635
        %v659 = vunpack.c.l.s4 1983009808
        %v660 = vunpack.c.0.s8 %v659
        %v661 = vlaneseq
        %v662 = vshrl.u32 %v661, 7
        %v663 = vsub.s32 %v660, %v662
        %v664 = vrot.slane %v656, %v663
        %v666 = vunpack.c.l.s4 1983009808
        %v667 = vunpack.c.0.s8 %v666
        %v668 = vlaneseq
        %v669 = vshrl.u32 %v668, 7
        %v670 = vsub.s32 %v667, %v669
        %v671 = vrot.slane %v657, %v670
        %v672 = vcombine.low %v648, %v664
        %v673 = vcombine.high %v648, %v664
        %v675 = vunpack.c.l.s4 1934713408
        %v676 = vunpack.c.0.s8 %v675
        %v677 = vlaneseq
        %v678 = vshrl.u32 %v677, 7
        %v679 = vsub.s32 %v676, %v678
        %v680 = vrot.slane %v672, %v679
        %v682 = vunpack.c.l.s4 1934713408
        %v683 = vunpack.c.0.s8 %v682
        %v684 = vlaneseq
        %v685 = vshrl.u32 %v684, 7
        %v686 = vsub.s32 %v683, %v685
        %v687 = vrot.slane %v673, %v686
        %v688 = vcombine.low %v655, %v671
        %v689 = vcombine.high %v655, %v671
        %v691 = vunpack.c.l.s4 1934713408
        %v692 = vunpack.c.0.s8 %v691
        %v693 = vlaneseq
        %v694 = vshrl.u32 %v693, 7
        %v695 = vsub.s32 %v692, %v694
        %v696 = vrot.slane %v688, %v695
        %v698 = vunpack.c.l.s4 1934713408
        %v699 = vunpack.c.0.s8 %v698
        %v700 = vlaneseq
        %v701 = vshrl.u32 %v700, 7
        %v702 = vsub.s32 %v699, %v701
        %v703 = vrot.slane %v689, %v702
        %v704 = vcombine.high %v680, 0.0
        %v705 = vcombine.high %v687, 0.0
        %v706 = vcombine.high %v696, 0.0
        %v707 = vcombine.high %v703, 0.0
        %v708 = vcombine.low %v680, %v687
        %v710 = vunpack.c.l.s4 1983009808
        %v711 = vunpack.c.0.s8 %v710
        %v712 = vlaneseq
        %v713 = vshrl.u32 %v712, 7
        %v714 = vsub.s32 %v711, %v713
        %v715 = vrot.slane %v708, %v714
        %v716 = vcombine.low %v704, %v705
        %v718 = vunpack.c.l.s4 1983009808
        %v719 = vunpack.c.0.s8 %v718
        %v720 = vlaneseq
        %v721 = vshrl.u32 %v720, 7
        %v722 = vsub.s32 %v719, %v721
        %v723 = vrot.slane %v716, %v722
        %v724 = vcombine.low %v696, %v703
        %v726 = vunpack.c.l.s4 1983009808
        %v727 = vunpack.c.0.s8 %v726
        %v728 = vlaneseq
        %v729 = vshrl.u32 %v728, 7
        %v730 = vsub.s32 %v727, %v729
        %v731 = vrot.slane %v724, %v730
        %v732 = vcombine.low %v706, %v707
        %v734 = vunpack.c.l.s4 1983009808
        %v735 = vunpack.c.0.s8 %v734
        %v736 = vlaneseq
        %v737 = vshrl.u32 %v736, 7
        %v738 = vsub.s32 %v735, %v737
        %v739 = vrot.slane %v732, %v738
        %v740 = vcombine.low %v715, %v723
        %v741 = vcombine.high %v715, %v723
        %v743 = vunpack.c.l.s4 1934713408
        %v744 = vunpack.c.0.s8 %v743
        %v745 = vlaneseq
        %v746 = vshrl.u32 %v745, 7
        %v747 = vsub.s32 %v744, %v746
        %v748 = vrot.slane %v740, %v747
        %v750 = vunpack.c.l.s4 1934713408
        %v751 = vunpack.c.0.s8 %v750
        %v752 = vlaneseq
        %v753 = vshrl.u32 %v752, 7
        %v754 = vsub.s32 %v751, %v753
        %v755 = vrot.slane %v741, %v754
        %v756 = vcombine.low %v731, %v739
        %v757 = vcombine.high %v731, %v739
        %v759 = vunpack.c.l.s4 1934713408
        %v760 = vunpack.c.0.s8 %v759
        %v761 = vlaneseq
        %v762 = vshrl.u32 %v761, 7
        %v763 = vsub.s32 %v760, %v762
        %v764 = vrot.slane %v756, %v763
        %v766 = vunpack.c.l.s4 1934713408
        %v767 = vunpack.c.0.s8 %v766
        %v768 = vlaneseq
        %v769 = vshrl.u32 %v768, 7
        %v770 = vsub.s32 %v767, %v769
        %v771 = vrot.slane %v757, %v770
        %v772 = vcombine.low %v748, %v764
        %v773 = vcombine.high %v748, %v764
        %v774 = vcombine.low %v755, %v771
        %v775 = vcombine.high %v755, %v771
        %776 = vst.msk [vmem:[%s359] sm:$0xff] %vm623, %v772
        %777 = vst.msk [vmem:[%s359 + $0x8] sm:$0xff] %vm623, %v773
        %778 = vst.msk [vmem:[%s359 + $0x10] sm:$0xff] %vm623, %v774
        %779 = vst.msk [vmem:[%s359 + $0x18] sm:$0xff] %vm623, %v775
        %780 = vrot.lane.b32.xlu0 %v474, 64
        %v781 = vpop.permute.xlu0 %780
        %782 = vrot.lane.b32.xlu0 %v479, 64
        %v783 = vpop.permute.xlu0 %782
        %784 = vrot.lane.b32.xlu0 %v482, 64
        %v785 = vpop.permute.xlu0 %784
        %786 = vrot.lane.b32.xlu0 %v485, 64
        %v787 = vpop.permute.xlu0 %786
        %v792 = vcombine.low %v781, %v785
        %v793 = vcombine.high %v781, %v785
        %v795 = vunpack.c.l.s4 1983009808
        %v796 = vunpack.c.0.s8 %v795
        %v797 = vlaneseq
        %v798 = vshrl.u32 %v797, 7
        %v799 = vsub.s32 %v796, %v798
        %v800 = vrot.slane %v792, %v799
        %v802 = vunpack.c.l.s4 1983009808
        %v803 = vunpack.c.0.s8 %v802
        %v804 = vlaneseq
        %v805 = vshrl.u32 %v804, 7
        %v806 = vsub.s32 %v803, %v805
        %v807 = vrot.slane %v793, %v806
        %v808 = vcombine.low %v783, %v787
        %v809 = vcombine.high %v783, %v787
        %v811 = vunpack.c.l.s4 1983009808
        %v812 = vunpack.c.0.s8 %v811
        %v813 = vlaneseq
        %v814 = vshrl.u32 %v813, 7
        %v815 = vsub.s32 %v812, %v814
        %v816 = vrot.slane %v808, %v815
        %v818 = vunpack.c.l.s4 1983009808
        %v819 = vunpack.c.0.s8 %v818
        %v820 = vlaneseq
        %v821 = vshrl.u32 %v820, 7
        %v822 = vsub.s32 %v819, %v821
        %v823 = vrot.slane %v809, %v822
        %v824 = vcombine.low %v800, %v816
        %v825 = vcombine.high %v800, %v816
        %v827 = vunpack.c.l.s4 1934713408
        %v828 = vunpack.c.0.s8 %v827
        %v829 = vlaneseq
        %v830 = vshrl.u32 %v829, 7
        %v831 = vsub.s32 %v828, %v830
        %v832 = vrot.slane %v824, %v831
        %v834 = vunpack.c.l.s4 1934713408
        %v835 = vunpack.c.0.s8 %v834
        %v836 = vlaneseq
        %v837 = vshrl.u32 %v836, 7
        %v838 = vsub.s32 %v835, %v837
        %v839 = vrot.slane %v825, %v838
        %v840 = vcombine.low %v807, %v823
        %v841 = vcombine.high %v807, %v823
        %v843 = vunpack.c.l.s4 1934713408
        %v844 = vunpack.c.0.s8 %v843
        %v845 = vlaneseq
        %v846 = vshrl.u32 %v845, 7
        %v847 = vsub.s32 %v844, %v846
        %v848 = vrot.slane %v840, %v847
        %v850 = vunpack.c.l.s4 1934713408
        %v851 = vunpack.c.0.s8 %v850
        %v852 = vlaneseq
        %v853 = vshrl.u32 %v852, 7
        %v854 = vsub.s32 %v851, %v853
        %v855 = vrot.slane %v841, %v854
        %v856 = vcombine.high %v832, 0.0
        %v857 = vcombine.high %v839, 0.0
        %v858 = vcombine.high %v848, 0.0
        %v859 = vcombine.high %v855, 0.0
        %v860 = vcombine.low %v832, %v839
        %v862 = vunpack.c.l.s4 1983009808
        %v863 = vunpack.c.0.s8 %v862
        %v864 = vlaneseq
        %v865 = vshrl.u32 %v864, 7
        %v866 = vsub.s32 %v863, %v865
        %v867 = vrot.slane %v860, %v866
        %v868 = vcombine.low %v856, %v857
        %v870 = vunpack.c.l.s4 1983009808
        %v871 = vunpack.c.0.s8 %v870
        %v872 = vlaneseq
        %v873 = vshrl.u32 %v872, 7
        %v874 = vsub.s32 %v871, %v873
        %v875 = vrot.slane %v868, %v874
        %v876 = vcombine.low %v848, %v855
        %v878 = vunpack.c.l.s4 1983009808
        %v879 = vunpack.c.0.s8 %v878
        %v880 = vlaneseq
        %v881 = vshrl.u32 %v880, 7
        %v882 = vsub.s32 %v879, %v881
        %v883 = vrot.slane %v876, %v882
        %v884 = vcombine.low %v858, %v859
        %v886 = vunpack.c.l.s4 1983009808
        %v887 = vunpack.c.0.s8 %v886
        %v888 = vlaneseq
        %v889 = vshrl.u32 %v888, 7
        %v890 = vsub.s32 %v887, %v889
        %v891 = vrot.slane %v884, %v890
        %v892 = vcombine.low %v867, %v875
        %v893 = vcombine.high %v867, %v875
        %v895 = vunpack.c.l.s4 1934713408
        %v896 = vunpack.c.0.s8 %v895
        %v897 = vlaneseq
        %v898 = vshrl.u32 %v897, 7
        %v899 = vsub.s32 %v896, %v898
        %v900 = vrot.slane %v892, %v899
        %v902 = vunpack.c.l.s4 1934713408
        %v903 = vunpack.c.0.s8 %v902
        %v904 = vlaneseq
        %v905 = vshrl.u32 %v904, 7
        %v906 = vsub.s32 %v903, %v905
        %v907 = vrot.slane %v893, %v906
        %v908 = vcombine.low %v883, %v891
        %v909 = vcombine.high %v883, %v891
        %v911 = vunpack.c.l.s4 1934713408
        %v912 = vunpack.c.0.s8 %v911
        %v913 = vlaneseq
        %v914 = vshrl.u32 %v913, 7
        %v915 = vsub.s32 %v912, %v914
        %v916 = vrot.slane %v908, %v915
        %v918 = vunpack.c.l.s4 1934713408
        %v919 = vunpack.c.0.s8 %v918
        %v920 = vlaneseq
        %v921 = vshrl.u32 %v920, 7
        %v922 = vsub.s32 %v919, %v921
        %v923 = vrot.slane %v909, %v922
        %v924 = vcombine.low %v900, %v916
        %v925 = vcombine.high %v900, %v916
        %v926 = vcombine.low %v907, %v923
        %v927 = vcombine.high %v907, %v923
        %928 = vst.msk [vmem:[%s366] sm:$0xff] %vm623, %v924
        %929 = vst.msk [vmem:[%s366 + $0x8] sm:$0xff] %vm623, %v925
        %930 = vst.msk [vmem:[%s366 + $0x10] sm:$0xff] %vm623, %v926
        %931 = vst.msk [vmem:[%s366 + $0x18] sm:$0xff] %vm623, %v927
        %s932 = sand.u32 %s168, 1
        %s933 = scalar_lea.sflag [#allocation4], %s932
        %s934 = sand.u32 %s168, 1
        %s935 = smul.addr %s934, 32
        %s936 = scalar_lea.vmem [#allocation8], %s935
        %s937 = sand.u32 %s29, 1
        %s938 = scalar_lea.sflag [#allocation10], %s937
        %s939 = sand.u32 %s196, 1
        %s940 = smul.addr %s939, 32
        %s941 = scalar_lea.vmem [#allocation9], %s940
        %s942 = sand.u32 %s29, 1
        %s943 = scalar_lea.sflag [#allocation10], %s942
        %s944 = sand.u32 %s224, 1
        %s945 = smul.addr %s944, 32
        %s946 = scalar_lea.vmem [#allocation11], %s945
        // Predicated region
        $region53: #{tpu_custom_call.1} parent=39 // pred_check
          %p947 = pneg %p178
        $region54: #{tpu_custom_call.1} parent=39 // pred_check_branch
          %949 = sbr.rel (%p947) target = $region56
        $region55: #{tpu_custom_call.1} parent=39 // pred_region
          %s951 = ssub.s32 512, 512
          %952 = vsyncadd %s933, %s951
          %s953 = smul.addr %s33, 4
          %s954 = sadd.s32 %s34, %s953
          %s955 = smul.addr %s954, 128
          %s956 = scalar_lea.hbm %s5, %s955
          %s957 = sshll.u32 %s936, 4
          %s958 = int_to_ptr.vmem [resolvable:$true] %s957
          %963 = dma.vmem_to_hbm [thread:$0]  %s958, 512, %s956, %s933, 128, 128, 8
        $region56: #{tpu_custom_call.1} parent=39 // pred_fallthru
          _
        // Predicated region
        $region57: #{tpu_custom_call.1} parent=39 // pred_check
          %p964 = pneg %p206
        $region58: #{tpu_custom_call.1} parent=39 // pred_check_branch
          %966 = sbr.rel (%p964) target = $region60
        $region59: #{tpu_custom_call.1} parent=39 // pred_region
          %s968 = ssub.s32 512, 512
          %969 = vsyncadd %s938, %s968
          %s970 = smul.addr %s33, 4
          %s971 = sadd.s32 %s34, %s970
          %s972 = smul.addr %s971, 128
          %s973 = scalar_lea.hbm %s6, %s972
          %s974 = sshll.u32 %s941, 4
          %s975 = int_to_ptr.vmem [resolvable:$true] %s974
          %980 = dma.vmem_to_hbm [thread:$0]  %s975, 512, %s973, %s938, 128, 128, 8
        $region60: #{tpu_custom_call.1} parent=39 // pred_fallthru
          _
        // Predicated region
        $region61: #{tpu_custom_call.1} parent=39 // pred_check
          %p981 = pneg %p234
        $region62: #{tpu_custom_call.1} parent=39 // pred_check_branch
          %983 = sbr.rel (%p981) target = $region64
        $region63: #{tpu_custom_call.1} parent=39 // pred_region
          %s985 = ssub.s32 512, 512
          %986 = vsyncadd %s943, %s985
          %s987 = smul.addr %s33, 4
          %s988 = sadd.s32 %s34, %s987
          %s989 = smul.addr %s988, 128
          %s990 = scalar_lea.hbm %s7, %s989
          %s991 = sshll.u32 %s946, 4
          %s992 = int_to_ptr.vmem [resolvable:$true] %s991
          %997 = dma.vmem_to_hbm [thread:$0]  %s992, 512, %s990, %s943, 128, 128, 8
        $region64: #{tpu_custom_call.1} parent=39 // pred_fallthru
          _
      $region40: #{tpu_custom_call.1} parent=5 // pred_fallthru
        _
      %p998 = scmp.le.s32.totalorder 2, %s24
      // Predicated region
      $region65: #{tpu_custom_call.1} parent=5 // pred_check
        %p999 = pneg %p998
      $region66: #{tpu_custom_call.1} parent=5 // pred_check_branch
        %1001 = sbr.rel (%p999) target = $region68
      $region67: #{tpu_custom_call.1} parent=5 // pred_region
        %s1002 = ssub.s32 %s24, 2
        // Predicated region
        $region69: #{tpu_custom_call.1} parent=67 // pred_check
          %p1003 = pneg %p184
        $region70: #{tpu_custom_call.1} parent=67 // pred_check_branch
          %1005 = sbr.rel (%p1003) target = $region72
        $region71: #{tpu_custom_call.1} parent=67 // pred_region
          %s1006 = sand.u32 %s169, 1
          %s1007 = scalar_lea.sflag [#allocation4], %s1006
          %s1008 = sand.u32 %s169, 1
          %s1009 = smul.addr %s1008, 32
          %s1010 = scalar_lea.vmem [#allocation8], %s1009
          %1011 = dma.done %s1007, 512
        $region72: #{tpu_custom_call.1} parent=67 // pred_fallthru
          _
        // Predicated region
        $region73: #{tpu_custom_call.1} parent=67 // pred_check
          %p1012 = pneg %p212
        $region74: #{tpu_custom_call.1} parent=67 // pred_check_branch
          %1014 = sbr.rel (%p1012) target = $region76
        $region75: #{tpu_custom_call.1} parent=67 // pred_region
          %s1015 = sand.u32 %s30, 1
          %s1016 = scalar_lea.sflag [#allocation10], %s1015
          %s1017 = sand.u32 %s197, 1
          %s1018 = smul.addr %s1017, 32
          %s1019 = scalar_lea.vmem [#allocation9], %s1018
          %1020 = dma.done %s1016, 512
        $region76: #{tpu_custom_call.1} parent=67 // pred_fallthru
          _
        // Predicated region
        $region77: #{tpu_custom_call.1} parent=67 // pred_check
          %p1021 = pneg %p240
        $region78: #{tpu_custom_call.1} parent=67 // pred_check_branch
          %1023 = sbr.rel (%p1021) target = $region80
        $region79: #{tpu_custom_call.1} parent=67 // pred_region
          %s1024 = sand.u32 %s30, 1
          %s1025 = scalar_lea.sflag [#allocation10], %s1024
          %s1026 = sand.u32 %s225, 1
          %s1027 = smul.addr %s1026, 32
          %s1028 = scalar_lea.vmem [#allocation11], %s1027
          %1029 = dma.done %s1025, 512
        $region80: #{tpu_custom_call.1} parent=67 // pred_fallthru
          _
      $region68: #{tpu_custom_call.1} parent=5 // pred_fallthru
        _
    $region6: #{tpu_custom_call.1} parent=1 // loop_footer
      %s28 = sadd.s32 1, %s24
    $region7: #{tpu_custom_call.1} parent=1 // loop_footer_branch
      %23 = sbr.rel target = $region3
    $region8: #{tpu_custom_call.1} parent=1 // loop_exit
      _
    %1030 = vsyncpa [#allocation3], 1
    %s1031 = scalar_lea.sflag [#allocation3], 1
    %1032 = vsyncpa %s1031, 1
    %1033 = vsyncpa [#allocation6], 1
    %1034 = vsyncpa [#allocation4], 1
    %s1035 = scalar_lea.sflag [#allocation4], 1
    %1036 = vsyncpa %s1035, 1
    %1037 = vsyncpa [#allocation10], 1
    %s1038 = scalar_lea.sflag [#allocation10], 1
    %1039 = vsyncpa %s1038, 1

</llo_original>
